<compile_context>
chip_gen: v6e
topology: v6e:2x2x1
jax: 0.10.0
libtpu: 0.0.40
codegen_flags: <defaults>
</compile_context>

<pallas_src>
import functools
import math

import jax
import jax.numpy as jnp
from jax import lax
from jax.experimental import pallas as pl
from jax.experimental.pallas import tpu as pltpu


def _pos_enc_kernel(x_ref, o_ref, pe_ref, *, tile_axis, pe_init_axis,
                    rows, lane_width, vector_dim, pos_per_row):
    """Adds positional encoding to one (rows, lane_width) block.

    x_ref / o_ref : (rows, lane_width) block of one batch element (batch dim
                    squeezed by the BlockSpec).  lane_width == pos_per_row *
                    vector_dim: each row packs pos_per_row consecutive
                    sequence positions along the lane axis.
    pe_ref        : (rows, lane_width) VMEM scratch in x.dtype; persists
                    across grid steps, recomputed only when the grid index
                    along `pe_init_axis` is 0.
    """
    # program_id only at the kernel top level (interpret-safe); values are
    # captured by the pl.when body as ordinary operands.
    tile_idx = pl.program_id(tile_axis)
    init_idx = pl.program_id(pe_init_axis)
    # Absolute sequence position of (row 0, lane-group 0) of this block.
    base_pos = tile_idx * (rows * pos_per_row)

    @pl.when(init_idx == 0)
    def _compute_pe():
        d = vector_dim
        lane = lax.broadcasted_iota(jnp.int32, (1, lane_width), 1)
        if pos_per_row == 1:
            dim = lane
        else:
            # pos_per_row > 1 only when d is a power of two, so // and % are
            # a shift and a mask (cheap VPU ops).
            dim = lane & (d - 1)
        dim_f = dim.astype(jnp.float32)
        # 1 / 10000**(2*dim/d) == exp(dim * (-2*ln(10000)/d))
        inv_freq = jnp.exp(dim_f * jnp.float32(-2.0 * math.log(10000.0) / d))
        # cos(x) == sin(x + pi/2): one EUP transcendental per element.
        phase = (dim & 1).astype(jnp.float32) * jnp.float32(math.pi / 2.0)

        row = lax.broadcasted_iota(jnp.int32, (rows, 1), 0)
        if pos_per_row == 1:
            pos = (base_pos + row).astype(jnp.float32)                # (rows, 1)
        else:
            shift = int(vector_dim).bit_length() - 1                  # log2(d)
            pos_in_row = lane >> shift                                # (1, L)
            pos = (base_pos + row * pos_per_row
                   + pos_in_row).astype(jnp.float32)                  # (rows, L)

        angle = pos * inv_freq + phase
        # f32 math; single cast into the I/O dtype on write (the add below
        # happens in x.dtype anyway, matching the PyTorch in-place add).
        pe_ref[...] = jnp.sin(angle).astype(pe_ref.dtype)

    # Steady state: pure vld / vadd / vst stream, HBM-bandwidth bound.
    # (bf16 adds on v5e are emulated through f32 by the VPU; no extra
    # converts are introduced here since the scratch already holds x.dtype.)
    o_ref[...] = x_ref[...] + pe_ref[...]


def _sublane_packing(itemsize: int) -> int:
    # Native sublane packing: 8 rows f32, 16 bf16, 32 int8/fp8.
    return max(8, 32 // itemsize)


def _choose_pos_per_row(seq_len: int, vector_dim: int) -> int:
    """Positions folded per row so the lane width is a multiple of 128."""
    if vector_dim % 128 == 0:
        return 1                                        # already lane-dense
    if vector_dim <= 128 and 128 % vector_dim == 0:     # power of two <= 128
        for width in (1024, 512, 256, 128):
            r = width // vector_dim
            if r >= 1 and seq_len % r == 0:
                return r
    return 1   # lane-sparse fallback (masked stores) for awkward vector_dim


def _choose_rows(total_rows: int, lane_width: int, itemsize: int,
                 sublane: int, budget_bytes: int) -> int:
    """Rows per block: biggest multiple of the sublane packing fitting the
    budget (2x double-buffered in + 2x out + 1x PE scratch). No divisibility
    requirement on total_rows: the ragged last tile is masked by Pallas."""
    per_row = lane_width * itemsize * 5
    rows = (budget_bytes // per_row) // sublane * sublane
    rows = max(sublane, rows)
    return total_rows if rows >= total_rows else rows


def positional_encoding(seqs: jax.Array,
                        *, vmem_budget_bytes: int = 16 * 1024 * 1024) -> jax.Array:
    """seqs: [batch, seq_len, vector_dim] -> same shape with PE added."""
    assert seqs.ndim == 3, (
        "You need to embed sequence to shape [batch_size, sequence_len, vector_dim]")
    b, s, d = seqs.shape
    itemsize = jnp.dtype(seqs.dtype).itemsize
    sublane = _sublane_packing(itemsize)

    # Lane-dense packing: view [b, s, d] as [b, s // r, r * d] (free reshape).
    r = _choose_pos_per_row(s, d)
    lane_width = r * d
    total_rows = s // r
    x = seqs if r == 1 else seqs.reshape(b, total_rows, lane_width)

    rows = _choose_rows(total_rows, lane_width, itemsize, sublane,
                        vmem_budget_bytes)
    num_tiles = (total_rows + rows - 1) // rows

    if num_tiles >= 2 or b == 1:
        # Normal case: seq tiles parallel (shards across TCs), batch inner
        # ("arbitrary") so the PE scratch is reused across batch elements.
        grid = (num_tiles, b)
        tile_axis, pe_init_axis = 0, 1
        index_map = lambda t, bi: (bi, t, 0)
    else:
        # Short-sequence fallback (single seq tile, batch >= 2): batch becomes
        # the parallel axis so both v7x TensorCores get work; PE is recomputed
        # per batch element (cheap, hidden under the block DMA).
        grid = (b, num_tiles)
        tile_axis, pe_init_axis = 1, 1
        index_map = lambda bi, t: (bi, t, 0)

    kernel = functools.partial(
        _pos_enc_kernel, tile_axis=tile_axis, pe_init_axis=pe_init_axis,
        rows=rows, lane_width=lane_width, vector_dim=d, pos_per_row=r)

    block = pl.BlockSpec((None, rows, lane_width), index_map)

    # VMEM limit from the actual requirement (+ headroom), not a blanket 48MiB.
    block_bytes = rows * lane_width * itemsize
    vmem_limit = max(16 << 20, min(96 << 20, 5 * block_bytes + (8 << 20)))

    out = pl.pallas_call(
        kernel,
        out_shape=jax.ShapeDtypeStruct((b, total_rows, lane_width), seqs.dtype),
        grid_spec=pltpu.PrefetchScalarGridSpec(
            num_scalar_prefetch=0,
            grid=grid,
            in_specs=[block],
            out_specs=block,
            # Scratch in the I/O dtype: steady-state add needs no convert.
            scratch_shapes=[pltpu.VMEM((rows, lane_width), seqs.dtype)],
        ),
        compiler_params=pltpu.CompilerParams(
            dimension_semantics=("parallel", "arbitrary"),
            vmem_limit_bytes=vmem_limit,
        ),
    )(x)

    return out if r == 1 else out.reshape(b, s, d)


def _reference(seqs: jnp.ndarray) -> jnp.ndarray:
    # Pure-JAX mirror of the PyTorch loops (including the module's
    # 2*dim/vector_dim exponent for both even and odd dims).
    _, s, d = seqs.shape
    pos = jnp.arange(s, dtype=jnp.float32)[:, None]
    dim = jnp.arange(d, dtype=jnp.float32)[None, :]
    angle = pos / jnp.power(jnp.float32(10000.0), 2.0 * dim / d)
    pe = jnp.where((jnp.arange(d) % 2 == 1)[None, :], jnp.cos(angle), jnp.sin(angle))
    return seqs + pe[None].astype(seqs.dtype)


if __name__ == "__main__":
    key = jax.random.PRNGKey(0)

    # Main case: [batch=2, seq=8, vector_dim=32] (lane-dense packed path,
    # single seq tile -> batch-parallel grid).
    x = jax.random.normal(key, (2, 8, 32), dtype=jnp.float32)
    out = jax.block_until_ready(positional_encoding(x))
    assert out.shape == x.shape
    assert jnp.allclose(out, _reference(x), atol=1e-4, rtol=1e-4)

    # Multi-tile case exercising PE-scratch reuse across batch (small forced
    # VMEM budget -> several sequence tiles) and the unpacked fallback layout
    # (vector_dim=100 is not a power of two).
    x2 = jax.random.normal(jax.random.PRNGKey(0), (2, 64, 100), dtype=jnp.float32)
    out2 = jax.block_until_ready(positional_encoding(x2, vmem_budget_bytes=32_000))
    assert out2.shape == x2.shape
    assert jnp.allclose(out2, _reference(x2), atol=1e-4, rtol=1e-4)

    print("KERNEL_OK")
</pallas_src>

<mosaic_0001>
module attributes {stable_mosaic.version = 11 : i64} {
  func.func @_pos_enc_kernel(%arg0: i32, %arg1: i32, %arg2: memref<1x1x256xf32, #tpu.memory_space<vmem>>, %arg3: memref<1x1x256xf32, #tpu.memory_space<vmem>>, %arg4: memref<1x256xf32, #tpu.memory_space<vmem>>) attributes {dimension_semantics = [#tpu.dimension_semantics<parallel>, #tpu.dimension_semantics<arbitrary>], iteration_bounds = array<i64: 2, 1>, scalar_prefetch = 0 : i64, scratch_operands = 1 : i64, tpu.core_type = #tpu.core_type<tc>, window_params = [{transform_indices = @transform_0, window_bounds = array<i64: 1, 1, 256>}, {transform_indices = @transform_1, window_bounds = array<i64: 1, 1, 256>}]} {
    %c8_i32 = arith.constant 8 : i32
    %0 = arith.muli %arg1, %c8_i32 : i32
    %c0_i32 = arith.constant 0 : i32
    %1 = arith.cmpi eq, %arg1, %c0_i32 : i32
    %2 = arith.extui %1 : i1 to i32
    %c0_i32_0 = arith.constant 0 : i32
    %3 = arith.cmpi ne, %2, %c0_i32_0 : i32
    scf.if %3 {
      %11 = tpu.iota {dimensions = array<i32: 1>} : vector<1x256xi32>
      %c31_i32 = arith.constant 31 : i32
      %12 = vector.broadcast %c31_i32 : i32 to vector<1x256xi32>
      %13 = arith.andi %11, %12 : vector<1x256xi32>
      %14 = arith.sitofp %13 : vector<1x256xi32> to vector<1x256xf32>
      %cst = arith.constant -0.575646281 : f32
      %15 = vector.broadcast %cst : f32 to vector<1x256xf32>
      %16 = arith.mulf %14, %15 : vector<1x256xf32>
      %17 = math.exp %16 : vector<1x256xf32>
      %c1_i32 = arith.constant 1 : i32
      %18 = vector.broadcast %c1_i32 : i32 to vector<1x256xi32>
      %19 = arith.andi %13, %18 : vector<1x256xi32>
      %20 = arith.sitofp %19 : vector<1x256xi32> to vector<1x256xf32>
      %cst_8 = arith.constant 1.57079637 : f32
      %21 = vector.broadcast %cst_8 : f32 to vector<1x256xf32>
      %22 = arith.mulf %20, %21 : vector<1x256xf32>
      %23 = tpu.iota {dimensions = array<i32: 0>} : vector<1x1xi32>
      %c5_i32 = arith.constant 5 : i32
      %24 = vector.broadcast %c5_i32 : i32 to vector<1x256xi32>
      %25 = arith.shrsi %11, %24 : vector<1x256xi32>
      %c8_i32_9 = arith.constant 8 : i32
      %26 = vector.broadcast %c8_i32_9 : i32 to vector<1x1xi32>
      %27 = arith.muli %23, %26 : vector<1x1xi32>
      %28 = vector.broadcast %0 : i32 to vector<1x1xi32>
      %29 = arith.addi %28, %27 : vector<1x1xi32>
      %30 = vector.broadcast %29 : vector<1x1xi32> to vector<1x256xi32>
      %31 = arith.addi %30, %25 : vector<1x256xi32>
      %32 = arith.sitofp %31 : vector<1x256xi32> to vector<1x256xf32>
      %33 = arith.mulf %32, %17 : vector<1x256xf32>
      %34 = arith.addf %33, %22 : vector<1x256xf32>
      %35 = math.sin %34 : vector<1x256xf32>
      %c0_10 = arith.constant 0 : index
      %c0_11 = arith.constant 0 : index
      %36 = vector.load %arg4[%c0_10, %c0_11] : memref<1x256xf32, #tpu.memory_space<vmem>>, vector<1x256xf32>
      tpu.vector_store %arg4[%c0_10, %c0_11], %35 {strides = array<i32>} : memref<1x256xf32, #tpu.memory_space<vmem>>, vector<1x256xf32>,
    } else {
    }
    %c0 = arith.constant 0 : index
    %c0_1 = arith.constant 0 : index
    %c0_2 = arith.constant 0 : index
    %4 = vector.load %arg2[%c0, %c0_1, %c0_2] : memref<1x1x256xf32, #tpu.memory_space<vmem>>, vector<1x1x256xf32>
    %5 = vector.shape_cast %4 : vector<1x1x256xf32> to vector<1x256xf32>
    %c0_3 = arith.constant 0 : index
    %c0_4 = arith.constant 0 : index
    %6 = vector.load %arg4[%c0_3, %c0_4] : memref<1x256xf32, #tpu.memory_space<vmem>>, vector<1x256xf32>
    %7 = arith.addf %5, %6 : vector<1x256xf32>
    %c0_5 = arith.constant 0 : index
    %c0_6 = arith.constant 0 : index
    %c0_7 = arith.constant 0 : index
    %8 = vector.load %arg3[%c0_5, %c0_6, %c0_7] : memref<1x1x256xf32, #tpu.memory_space<vmem>>, vector<1x1x256xf32>
    %9 = vector.shape_cast %8 : vector<1x1x256xf32> to vector<1x256xf32>
    %10 = vector.shape_cast %7 : vector<1x256xf32> to vector<1x1x256xf32>
    tpu.vector_store %arg3[%c0_5, %c0_6, %c0_7], %10 {strides = array<i32>} : memref<1x1x256xf32, #tpu.memory_space<vmem>>, vector<1x1x256xf32>,
    return
  }
  func.func @transform_0(%arg0: i32, %arg1: i32) -> (i32, i32, i32) {
    %c0_i32 = arith.constant 0 : i32
    %c0_i32_0 = arith.constant 0 : i32
    return %arg0, %arg1, %c0_i32 : i32, i32, i32
  }
  func.func @transform_1(%arg0: i32, %arg1: i32) -> (i32, i32, i32) {
    %c0_i32 = arith.constant 0 : i32
    %c0_i32_0 = arith.constant 0 : i32
    return %arg0, %arg1, %c0_i32 : i32, i32, i32
  }
}

</mosaic_0001>

<llo_original>
// kernel: tpu_custom_call.1
$region0: #{tpu_custom_call.1}
  #allocation0 [shape = 'u32[]', space=smem, size = 0x4, offset = 0x4, fixed_abs, tag = 'smem constant byte address 0x4 - core index']
  #allocation1 [shape = 'u32[144,128]{1,0:T(1,128)}', space=vmem, size = 0x12000, scoped, tag = 'internal scratch']
  #allocation2 [shape = 'f32[1,256]{1,0:T(1,128)}', space=vmem, size = 0x400, scoped, tag = 'scratch operand']
  %s0 = inlined_call_operand.hbm [shape: f32[2,1,256], index: 0, kind: input, shape index: {}]
  %s1 = inlined_call_operand.hbm [shape: f32[2,1,256], index: 1, kind: output, shape index: {}]
  %s2 = sld [smem:[#allocation0]]
  $region45: #{tpu_custom_call.1} parent=0
    _
  %s4 = ssub.s32 1, %s2
  %s5 = scalar_select 0, %s4, %s2
  $region1: #{tpu_custom_call.1} parent=0
    #allocation3 [shape = 'u8[2048]{0}', space=vmem, size = 0x800, scoped, tag = 'input window, operand 0']
    #allocation4 [shape = 's32[2]{0}', space=sflag, size = 0x8, scoped, tag = 'scoped memory for tpu_custom_call.1']
    #allocation5 [shape = 's32[2]{0}', space=sflag, size = 0x8, scoped, tag = 'scoped memory for tpu_custom_call.1']
    #allocation6 [shape = 'u8[2048]{0}', space=vmem, size = 0x800, scoped, tag = 'output window, operand 0']
    %6 = vsyncpa [#allocation4], 0
    %s7 = scalar_lea.sflag [#allocation4], 1
    %8 = vsyncpa %s7, 0
    %9 = vsyncpa [#allocation5], 0
    %s10 = scalar_lea.sflag [#allocation5], 1
    %11 = vsyncpa %s10, 0
    loop: start=0, step=1, limit=4
    $region2: #{tpu_custom_call.1} parent=1 // loop_pre_header
      _
    $region3: #{tpu_custom_call.1} parent=1 // loop_header
      %s13 = sphi 0, %s17
      %p14 = scmp.ge.s32.totalorder %s13, 4
      %s20 = sphi 0, %s32
      %s21 = sphi 0, %s28
      %s22 = sphi 0, %s20
      %s23 = sphi 0, %s21
      %s24 = sphi 0, %s22
      %s25 = sphi 0, %s23
      %s37 = sphi 0, %s39
      %s40 = sphi 0, %s37
      %s41 = sphi 0, %s40
      %s57 = sphi 0, %s41
      %s65 = sphi 0, %s67
      %s68 = sphi 0, %s65
      %s69 = sphi 0, %s68
      %s85 = sphi 0, %s69
    $region4: #{tpu_custom_call.1} parent=1 // loop_header_branch
      %16 = sbr.rel (%p14) target = $region8
    $region5: #{tpu_custom_call.1} parent=1 // loop_body
      %s18 = ssub.s32 %s13, 1
      %s19 = ssub.s32 %s13, 2
      %s26 = sadd.s32 1, %s21
      %p27 = scmp.ge.s32.totalorder %s26, 1
      %s28 = scalar_select %p27, 0, %s26
      %s29 = sadd.s32 1, %s20
      %s30 = scalar_select %p27, %s29, %s20
      %p31 = scmp.ge.s32.totalorder %s30, 2
      %s32 = scalar_select %p31, 0, %s30
      %s33 = ssub.s32 %s20, %s32
      %s34 = ssub.s32 %s21, %s28
      %s35 = sor.u32 %s33, %s34
      %p36 = scmp.eq.s32.totalorder %s35, 0
      %s38 = sadd.s32 %s37, 1
      %s39 = scalar_select %p36, %s37, %s38
      %p42 = pneg %p36
      %p43 = scmp.eq.s32.totalorder %s13, 1
      %p44 = por %p42, %p43
      %p45 = scmp.ne.s32.totalorder %s37, %s40
      %p46 = scmp.eq.s32.totalorder %s13, 0
      %p47 = por %p45, %p46
      %p48 = scmp.ne.s32.totalorder %s37, %s40
      %p49 = scmp.eq.s32.totalorder %s18, 1
      %p50 = por %p48, %p49
      %p51 = scmp.ne.s32.totalorder %s40, %s41
      %p52 = scmp.eq.s32.totalorder %s18, 0
      %p53 = por %p51, %p52
      %p54 = scmp.ne.s32.totalorder %s40, %s41
      %p55 = scmp.eq.s32.totalorder %s19, 1
      %p56 = por %p54, %p55
      %p58 = scmp.ne.s32.totalorder %s41, %s57
      %p59 = scmp.eq.s32.totalorder %s19, 0
      %p60 = por %p58, %p59
      %s61 = ssub.s32 %s20, %s32
      %s62 = ssub.s32 %s21, %s28
      %s63 = sor.u32 %s61, %s62
      %p64 = scmp.eq.s32.totalorder %s63, 0
      %s66 = sadd.s32 %s65, 1
      %s67 = scalar_select %p64, %s65, %s66
      %p70 = pneg %p64
      %p71 = scmp.eq.s32.totalorder %s13, 1
      %p72 = por %p70, %p71
      %p73 = scmp.ne.s32.totalorder %s65, %s68
      %p74 = scmp.eq.s32.totalorder %s13, 0
      %p75 = por %p73, %p74
      %p76 = scmp.ne.s32.totalorder %s65, %s68
      %p77 = scmp.eq.s32.totalorder %s18, 1
      %p78 = por %p76, %p77
      %p79 = scmp.ne.s32.totalorder %s68, %s69
      %p80 = scmp.eq.s32.totalorder %s18, 0
      %p81 = por %p79, %p80
      %p82 = scmp.ne.s32.totalorder %s68, %s69
      %p83 = scmp.eq.s32.totalorder %s19, 1
      %p84 = por %p82, %p83
      %p86 = scmp.ne.s32.totalorder %s69, %s85
      %p87 = scmp.eq.s32.totalorder %s19, 0
      %p88 = por %p86, %p87
      %p89 = scmp.le.s32.totalorder 1, %s13
      %p90 = scmp.lt.s32.totalorder %s13, 3
      %p91 = pnand %p89, %p90
      %p92 = pneg %p91
      // Predicated region
      $region9: #{tpu_custom_call.1} parent=5 // pred_check
        _
      $region10: #{tpu_custom_call.1} parent=5 // pred_check_branch
        %94 = sbr.rel (%p91) target = $region12
      $region11: #{tpu_custom_call.1} parent=5 // pred_region
        %s95 = ssub.s32 %s13, 1
      $region12: #{tpu_custom_call.1} parent=5 // pred_fallthru
        _
      %p96 = scmp.lt.s32.totalorder %s13, 2
      // Predicated region
      $region13: #{tpu_custom_call.1} parent=5 // pred_check
        %p97 = pneg %p96
      $region14: #{tpu_custom_call.1} parent=5 // pred_check_branch
        %99 = sbr.rel (%p97) target = $region16
      $region15: #{tpu_custom_call.1} parent=5 // pred_region
        // Predicated region
        $region17: #{tpu_custom_call.1} parent=15 // pred_check
          %p100 = pneg %p47
        $region18: #{tpu_custom_call.1} parent=15 // pred_check_branch
          %102 = sbr.rel (%p100) target = $region20
        $region19: #{tpu_custom_call.1} parent=15 // pred_region
          %s103 = sand.u32 %s37, 1
          %s104 = scalar_lea.sflag [#allocation4], %s103
          %s105 = sand.u32 %s37, 1
          %s106 = smul.addr %s105, 2
          %s107 = scalar_lea.vmem [#allocation3], %s106
          %s109 = ssub.s32 32, 32
          %110 = vsyncadd %s104, %s109
          %s111 = smul.addr %s21, 2
          %s112 = smul.addr %s20, 2
          %s113 = sadd.s32 %s111, %s112
          %s114 = smul.addr %s113, 16
          %s115 = scalar_lea.hbm %s0, %s114
          %s117 = sshll.u32 %s107, 4
          %s118 = int_to_ptr.vmem [resolvable:$true] %s117
          %120 = dma.hbm_to_vmem [thread:$0]  %s115, 32, %s118, %s104
        $region20: #{tpu_custom_call.1} parent=15 // pred_fallthru
          _
      $region16: #{tpu_custom_call.1} parent=5 // pred_fallthru
        _
      %p121 = scmp.le.s32.totalorder 1, %s13
      %p122 = scmp.lt.s32.totalorder %s13, 3
      %p123 = pnand %p121, %p122
      %p124 = pneg %p123
      // Predicated region
      $region21: #{tpu_custom_call.1} parent=5 // pred_check
        _
      $region22: #{tpu_custom_call.1} parent=5 // pred_check_branch
        %126 = sbr.rel (%p123) target = $region24
      $region23: #{tpu_custom_call.1} parent=5 // pred_region
        %s127 = ssub.s32 %s13, 1
        %s128 = sand.u32 %s40, 1
        %s129 = scalar_lea.sflag [#allocation4], %s128
        %s130 = sand.u32 %s40, 1
        %s131 = smul.addr %s130, 2
        %s132 = scalar_lea.vmem [#allocation3], %s131
        // Predicated region
        $region25: #{tpu_custom_call.1} parent=23 // pred_check
          %p133 = pneg %p53
        $region26: #{tpu_custom_call.1} parent=23 // pred_check_branch
          %135 = sbr.rel (%p133) target = $region28
        $region27: #{tpu_custom_call.1} parent=23 // pred_region
          %136 = dma.done %s129, 32
        $region28: #{tpu_custom_call.1} parent=23 // pred_fallthru
          _
        %s137 = sand.u32 %s40, 1
        %s138 = scalar_lea.sflag [#allocation4], %s137
        %s139 = sand.u32 %s40, 1
        %s140 = smul.addr %s139, 2
        %s141 = scalar_lea.vmem [#allocation3], %s140
        %p142 = pneg %p53
        %p143 = pneg %p50
        %p144 = pneg %p81
        %p145 = pneg %p78
        %s146 = sand.u32 %s68, 1
        %s147 = scalar_lea.sflag [#allocation5], %s146
        %s148 = sand.u32 %s68, 1
        %s149 = smul.addr %s148, 2
        %s150 = scalar_lea.vmem [#allocation6], %s149
        %s151 = smul.u32 %s23, 8
        %p152 = scmp.eq.s32.totalorder %s23, 0
        // Predicated region
        $region29: #{tpu_custom_call.1} parent=23 // pred_check
          %p153 = pneg %p152
        $region30: #{tpu_custom_call.1} parent=23 // pred_check_branch
          %155 = sbr.rel (%p153) target = $region32
        $region31: #{tpu_custom_call.1} parent=23 // pred_region
          %v156 = vlaneseq
          %v157 = vand.u32 %v156, 127
          %v158 = vadd.s32 %v157, 128
          %v159 = vand.u32 %v157, 31
          %v160 = vand.u32 %v158, 31
          %v161 = vcvt.s32.f32 %v159
          %v162 = vcvt.s32.f32 %v160
          %v163 = vmul.f32 %v161, -0.5756463
          %v164 = vmul.f32 %v162, -0.5756463
          %v165 = vmul.f32 %v163, 1.442695
          %v166 = vpow.pop %v165
          %v167 = vmul.f32 %v164, 1.442695
          %v168 = vpow.pop %v167
          %v169 = vand.u32 %v159, 1
          %v170 = vand.u32 %v160, 1
          %v171 = vcvt.s32.f32 %v169
          %v172 = vcvt.s32.f32 %v170
          %v173 = vmul.f32 %v171, 1.5707964
          %v174 = vmul.f32 %v172, 1.5707964
          %v175 = vlaneseq
          %v176 = vshrl.u32 %v175, 7
          %v177 = vshra.s32 %v157, 5
          %v178 = vshra.s32 %v158, 5
          %v179 = vmul.u32 %v176, 8
          %v180 = vstv %s151
          %v181 = vadd.s32 %v180, %v179
          %v182 = vadd.s32 %v181, %v177
          %v183 = vadd.s32 %v181, %v178
          %v184 = vcvt.s32.f32 %v182
          %v185 = vcvt.s32.f32 %v183
          %v186 = vmul.f32 %v184, %v166
          %v187 = vmul.f32 %v185, %v168
          %v188 = vadd.f32 %v186, %v173
          %v189 = vadd.f32 %v187, %v174
          %v190 = vand.u32 2147483647, %v188
          %vm191 = vcmp.le.f32.partialorder %v190, 0.7853982
          %vm192 = vcmp.lt.s32.totalorder %v188, 0
          %v193 = vand.u32 %v188, 2139095040
          %v194 = vshrl.u32 %v193, 23
          %v195 = vsub.s32 %v194, 127
          %v196 = vand.u32 2147483647, %v188
          %v197 = vand.u32 %v196, 8388607
          %v198 = vor.u32 %v197, 8388608
          %v199 = vsub.s32 0, %v198
          %v200 = vadd.s32 %v195, 1
          %vm201 = vcmp.gt.s32.totalorder %v200, 0
          %v202 = vsel %vm201, %v200, 0
          %v203 = vshrl.u32 %v202, 5
          %v204 = vand.u32 %v202, 31
          %v205 = vsub.s32 32, %v204
          %v206 = vshrl.u32 683565275, %v205
          %v207 = vshll.u32 683565275, %v204
          %v208 = vshrl.u32 2475754826, %v205
          %v209 = vor.u32 %v207, %v208
          %v210 = vshll.u32 2475754826, %v204
          %v211 = vshrl.u32 2131351028, %v205
          %v212 = vor.u32 %v210, %v211
          %v213 = vshll.u32 2131351028, %v204
          %v214 = vshrl.u32 2102212464, %v205
          %v215 = vor.u32 %v213, %v214
          %v216 = vshll.u32 2102212464, %v204
          %v217 = vshrl.u32 920167782, %v205
          %v218 = vor.u32 %v216, %v217
          %v219 = vshll.u32 920167782, %v204
          %v220 = vshrl.u32 1326507024, %v205
          %v221 = vor.u32 %v219, %v220
          %vm222 = vcmp.lt.s32.totalorder %v203, 1
          %vm223 = vcmp.lt.s32.totalorder %v203, 2
          %vm224 = vcmp.lt.s32.totalorder %v203, 3
          %vm225 = vcmp.lt.s32.totalorder %v203, 4
          %v226 = vsel %vm222, %v206, %v209
          %v227 = vsel %vm225, %v215, 2102212464
          %v228 = vsel %vm224, %v212, %v227
          %v229 = vsel %vm223, %v226, %v228
          %v230 = vsel %vm222, %v209, %v212
          %v231 = vsel %vm225, %v218, 920167782
          %v232 = vsel %vm224, %v215, %v231
          %v233 = vsel %vm223, %v230, %v232
          %v234 = vsel %vm222, %v212, %v215
          %v235 = vsel %vm225, %v221, 1326507024
          %v236 = vsel %vm224, %v218, %v235
          %v237 = vsel %vm223, %v234, %v236
          %v238 = vshll.u32 %v198, 8
          %v239 = vmul.u32.u64.compose %v238, %v237
          %v240 = vextract.low.u32 %v239
          %v241 = vextract.high.u32 %v239
          %v242 = vmul.u32.u64.compose %v238, %v233
          %v243 = vextract.low.u32 %v242
          %v244 = vextract.high.u32 %v242
          %v245 = vmul.u32 %v238, %v229
          %v246 = vadd.s32 %v241, %v243
          %vm247 = vc.u32 %v241, %v243
          %v248 = vadd.s32 %v244, 1
          %v249 = vsel %vm247, %v248, %v244
          %v250 = vadd.s32 %v245, %v249
          %v251 = vadd.s32 %v250, 536870912
          %v252 = vshrl.u32 %v251, 30
          %v253 = vshll.u32 %v252, 30
          %v254 = vsub.s32 %v250, %v253
          %vm255 = vcmp.lt.s32.totalorder %v254, 0
          %v256 = vsub.s32 0, %v254
          %v257 = vsel %vm255, %v256, %v254
          %v258 = vclz %v257
          %v259 = vsub.s32 %v258, 2
          %vm260 = vcmp.gt.s32.totalorder 0, %v259
          %v261 = vsel %vm260, 0, %v259
          %v262 = vsub.s32 32, %v261
          %v263 = vshll.u32 %v254, %v261
          %v264 = vshrl.u32 %v246, %v262
          %v265 = vor.u32 %v263, %v264
          %v266 = vsub.s32 4294967266, %v261
          %v267 = vadd.s32 %v266, 127
          %v268 = vshll.u32 %v267, 23
          %v269 = vor.u32 4788187, %v268
          %v270 = vand.u32 2147483647, %v269
          %v272 = vcvt.s32.f32 %v265
          %v273 = vmul.f32 %v272, %v270
          %v274 = vxor.u32 %v273, 2147483648
          %v275 = vsel %vm192, %v274, %v273
          %v276 = vsub.s32 4, %v252
          %v277 = vsel %vm192, %v276, %v252
          %v278 = vsel %vm191, %v188, %v275
          %v279 = vsel %vm191, 0, %v277
          %v280 = vcosq.f32.pop %v278
          %v281 = vsinq.f32.pop %v278
          %vm282 = vweird.f32 %v188
          %v283 = vadd.s32 %v279, 3
          %v284 = vand.u32 %v283, 3
          %vm285 = vcmp.lt.s32.totalorder %v284, 2
          %vm286 = vcmp.eq.s32.totalorder %v284, 0
          %v287 = vxor.u32 %v281, 2147483648
          %v288 = vsel %vm286, %v280, %v287
          %vm289 = vcmp.eq.s32.totalorder %v284, 2
          %v290 = vxor.u32 %v280, 2147483648
          %v291 = vsel %vm289, %v290, %v281
          %v292 = vsel %vm285, %v288, %v291
          %v293 = vsel %vm282, nan, %v292
          %v294 = vand.u32 2147483647, %v189
          %vm295 = vcmp.le.f32.partialorder %v294, 0.7853982
          %vm296 = vcmp.lt.s32.totalorder %v189, 0
          %v297 = vand.u32 %v189, 2139095040
          %v298 = vshrl.u32 %v297, 23
          %v299 = vsub.s32 %v298, 127
          %v300 = vand.u32 2147483647, %v189
          %v301 = vand.u32 %v300, 8388607
          %v302 = vor.u32 %v301, 8388608
          %v303 = vsub.s32 0, %v302
          %v304 = vadd.s32 %v299, 1
          %vm305 = vcmp.gt.s32.totalorder %v304, 0
          %v306 = vsel %vm305, %v304, 0
          %v307 = vshrl.u32 %v306, 5
          %v308 = vand.u32 %v306, 31
          %v309 = vsub.s32 32, %v308
          %v310 = vshrl.u32 683565275, %v309
          %v311 = vshll.u32 683565275, %v308
          %v312 = vshrl.u32 2475754826, %v309
          %v313 = vor.u32 %v311, %v312
          %v314 = vshll.u32 2475754826, %v308
          %v315 = vshrl.u32 2131351028, %v309
          %v316 = vor.u32 %v314, %v315
          %v317 = vshll.u32 2131351028, %v308
          %v318 = vshrl.u32 2102212464, %v309
          %v319 = vor.u32 %v317, %v318
          %v320 = vshll.u32 2102212464, %v308
          %v321 = vshrl.u32 920167782, %v309
          %v322 = vor.u32 %v320, %v321
          %v323 = vshll.u32 920167782, %v308
          %v324 = vshrl.u32 1326507024, %v309
          %v325 = vor.u32 %v323, %v324
          %vm326 = vcmp.lt.s32.totalorder %v307, 1
          %vm327 = vcmp.lt.s32.totalorder %v307, 2
          %vm328 = vcmp.lt.s32.totalorder %v307, 3
          %vm329 = vcmp.lt.s32.totalorder %v307, 4
          %v330 = vsel %vm326, %v310, %v313
          %v331 = vsel %vm329, %v319, 2102212464
          %v332 = vsel %vm328, %v316, %v331
          %v333 = vsel %vm327, %v330, %v332
          %v334 = vsel %vm326, %v313, %v316
          %v335 = vsel %vm329, %v322, 920167782
          %v336 = vsel %vm328, %v319, %v335
          %v337 = vsel %vm327, %v334, %v336
          %v338 = vsel %vm326, %v316, %v319
          %v339 = vsel %vm329, %v325, 1326507024
          %v340 = vsel %vm328, %v322, %v339
          %v341 = vsel %vm327, %v338, %v340
          %v342 = vshll.u32 %v302, 8
          %v343 = vmul.u32.u64.compose %v342, %v341
          %v344 = vextract.low.u32 %v343
          %v345 = vextract.high.u32 %v343
          %v346 = vmul.u32.u64.compose %v342, %v337
          %v347 = vextract.low.u32 %v346
          %v348 = vextract.high.u32 %v346
          %v349 = vmul.u32 %v342, %v333
          %v350 = vadd.s32 %v345, %v347
          %vm351 = vc.u32 %v345, %v347
          %v352 = vadd.s32 %v348, 1
          %v353 = vsel %vm351, %v352, %v348
          %v354 = vadd.s32 %v349, %v353
          %v355 = vadd.s32 %v354, 536870912
          %v356 = vshrl.u32 %v355, 30
          %v357 = vshll.u32 %v356, 30
          %v358 = vsub.s32 %v354, %v357
          %vm359 = vcmp.lt.s32.totalorder %v358, 0
          %v360 = vsub.s32 0, %v358
          %v361 = vsel %vm359, %v360, %v358
          %v362 = vclz %v361
          %v363 = vsub.s32 %v362, 2
          %vm364 = vcmp.gt.s32.totalorder 0, %v363
          %v365 = vsel %vm364, 0, %v363
          %v366 = vsub.s32 32, %v365
          %v367 = vshll.u32 %v358, %v365
          %v368 = vshrl.u32 %v350, %v366
          %v369 = vor.u32 %v367, %v368
          %v370 = vsub.s32 4294967266, %v365
          %v371 = vadd.s32 %v370, 127
          %v372 = vshll.u32 %v371, 23
          %v373 = vor.u32 4788187, %v372
          %v374 = vand.u32 2147483647, %v373
          %v376 = vcvt.s32.f32 %v369
          %v377 = vmul.f32 %v376, %v374
          %v378 = vxor.u32 %v377, 2147483648
          %v379 = vsel %vm296, %v378, %v377
          %v380 = vsub.s32 4, %v356
          %v381 = vsel %vm296, %v380, %v356
          %v382 = vsel %vm295, %v189, %v379
          %v383 = vsel %vm295, 0, %v381
          %v384 = vcosq.f32.pop %v382
          %v385 = vsinq.f32.pop %v382
          %vm386 = vweird.f32 %v189
          %v387 = vadd.s32 %v383, 3
          %v388 = vand.u32 %v387, 3
          %vm389 = vcmp.lt.s32.totalorder %v388, 2
          %vm390 = vcmp.eq.s32.totalorder %v388, 0
          %v391 = vxor.u32 %v385, 2147483648
          %v392 = vsel %vm390, %v384, %v391
          %vm393 = vcmp.eq.s32.totalorder %v388, 2
          %v394 = vxor.u32 %v384, 2147483648
          %v395 = vsel %vm393, %v394, %v385
          %v396 = vsel %vm389, %v392, %v395
          %v397 = vsel %vm386, nan, %v396
          %v400 = vcombine.low %v293, %v397
          %v402 = vunpack.c.l.s4 1966171168
          %v403 = vunpack.c.0.s8 %v402
          %v404 = vlaneseq
          %v405 = vshrl.u32 %v404, 7
          %v406 = vsub.s32 %v403, %v405
          %v407 = vrot.slane %v400, %v406
          %v409 = vunpack.c.l.s4 1966171168
          %v410 = vunpack.c.0.s8 %v409
          %v411 = vlaneseq
          %v412 = vshrl.u32 %v411, 7
          %v413 = vsub.s32 %v410, %v412
          %v414 = vrot.slane %v407, %v413
          %v416 = vlaneseq
          %vm417 = vcmp.ge.s32.totalorder %v416, 0
          %vm418 = vcmp.lt.s32.totalorder %v416, 256
          %vm419 = vmand %vm417, %vm418
          %420 = vst.msk [vmem:[#allocation2] sm:$0x3] %vm419, %v414
        $region32: #{tpu_custom_call.1} parent=23 // pred_fallthru
          _
        %v421 = vld [vmem:[%s132] sm:$0x3]
        %v422 = vld [vmem:[#allocation2] sm:$0x3]
        %v423 = vadd.f32 %v421, %v422
        %v424 = vlaneseq
        %vm425 = vcmp.ge.s32.totalorder %v424, 0
        %vm426 = vcmp.lt.s32.totalorder %v424, 256
        %vm427 = vmand %vm425, %vm426
        %428 = vst.msk [vmem:[%s150] sm:$0x3] %vm427, %v423
        %s429 = sand.u32 %s68, 1
        %s430 = scalar_lea.sflag [#allocation5], %s429
        %s431 = sand.u32 %s68, 1
        %s432 = smul.addr %s431, 2
        %s433 = scalar_lea.vmem [#allocation6], %s432
        // Predicated region
        $region33: #{tpu_custom_call.1} parent=23 // pred_check
          %p434 = pneg %p78
        $region34: #{tpu_custom_call.1} parent=23 // pred_check_branch
          %436 = sbr.rel (%p434) target = $region36
        $region35: #{tpu_custom_call.1} parent=23 // pred_region
          %s438 = ssub.s32 32, 32
          %439 = vsyncadd %s430, %s438
          %s440 = smul.addr %s23, 2
          %s441 = smul.addr %s22, 2
          %s442 = sadd.s32 %s440, %s441
          %s443 = smul.addr %s442, 16
          %s444 = scalar_lea.hbm %s1, %s443
          %s446 = sshll.u32 %s433, 4
          %s447 = int_to_ptr.vmem [resolvable:$true] %s446
          %449 = dma.vmem_to_hbm [thread:$0]  %s447, 32, %s444, %s430
        $region36: #{tpu_custom_call.1} parent=23 // pred_fallthru
          _
      $region24: #{tpu_custom_call.1} parent=5 // pred_fallthru
        _
      %p450 = scmp.le.s32.totalorder 2, %s13
      // Predicated region
      $region37: #{tpu_custom_call.1} parent=5 // pred_check
        %p451 = pneg %p450
      $region38: #{tpu_custom_call.1} parent=5 // pred_check_branch
        %453 = sbr.rel (%p451) target = $region40
      $region39: #{tpu_custom_call.1} parent=5 // pred_region
        %s454 = ssub.s32 %s13, 2
        // Predicated region
        $region41: #{tpu_custom_call.1} parent=39 // pred_check
          %p455 = pneg %p84
        $region42: #{tpu_custom_call.1} parent=39 // pred_check_branch
          %457 = sbr.rel (%p455) target = $region44
        $region43: #{tpu_custom_call.1} parent=39 // pred_region
          %s458 = sand.u32 %s69, 1
          %s459 = scalar_lea.sflag [#allocation5], %s458
          %s460 = sand.u32 %s69, 1
          %s461 = smul.addr %s460, 2
          %s462 = scalar_lea.vmem [#allocation6], %s461
          %463 = dma.done %s459, 32
        $region44: #{tpu_custom_call.1} parent=39 // pred_fallthru
          _
      $region40: #{tpu_custom_call.1} parent=5 // pred_fallthru
        _
    $region6: #{tpu_custom_call.1} parent=1 // loop_footer
      %s17 = sadd.s32 1, %s13
    $region7: #{tpu_custom_call.1} parent=1 // loop_footer_branch
      %12 = sbr.rel target = $region3
    $region8: #{tpu_custom_call.1} parent=1 // loop_exit
      _
    %464 = vsyncpa [#allocation4], 1
    %s465 = scalar_lea.sflag [#allocation4], 1
    %466 = vsyncpa %s465, 1
    %467 = vsyncpa [#allocation5], 1
    %s468 = scalar_lea.sflag [#allocation5], 1
    %469 = vsyncpa %s468, 1

</llo_original>
